<compile_context>
chip_gen: v7x
topology: tpu7x:2x2x1
jax: 0.10.0
libtpu: 0.0.40
codegen_flags: <defaults>
</compile_context>

<pallas_src>
import functools

import jax
import jax.numpy as jnp
from jax.experimental import pallas as pl
from jax.experimental.pallas import tpu as pltpu


def _pad_to(n, m):
    return (n + m - 1) // m * m


def _default_vmem_limit():
    cap = 128 * 1024 * 1024
    try:
        cap = pltpu.get_tpu_info().vmem_capacity_bytes
    except Exception:
        pass
    return max(16 * 1024 * 1024, min(48 * 1024 * 1024, cap // 2))


VMEM_LIMIT = _default_vmem_limit()
NEG = -1e30  # max-pool padding value (inputs are post-ReLU and bf16-representable)


def _stable_sigmoid(y):
    z = jnp.exp(-jnp.abs(y))
    return jnp.where(y >= 0, 1.0 / (1.0 + z), z / (1.0 + z))


def _largest_divisor(n, cap, mult):
    """Largest divisor of n that is <= cap and a multiple of mult (None if none)."""
    best = None
    d = mult
    lim = min(n, cap)
    while d <= lim:
        if n % d == 0:
            best = d
        d += mult
    return best


# --------------------------------------------------------------------------------------
# Fused matmul: act((x @ w) * scale + shift [+ residual]) — 1x1 convs, im2col convs
# (stem + stride-2 3x3) and the fused residual/ReLU epilogue of conv3.
# --------------------------------------------------------------------------------------

def _fused_matmul_kernel(x_ref, w_ref, s_ref, b_ref, *rest, activation, has_res):
    if has_res:
        r_ref, o_ref, acc_ref = rest
    else:
        o_ref, acc_ref = rest
        r_ref = None
    k = pl.program_id(2)

    @pl.when(k == 0)
    def _():
        acc_ref[...] = jnp.zeros_like(acc_ref)

    acc_ref[...] += jnp.dot(x_ref[...], w_ref[...], preferred_element_type=jnp.float32)

    @pl.when(k == pl.num_programs(2) - 1)
    def _():
        y = acc_ref[...] * s_ref[...] + b_ref[...]
        if has_res:
            y = y + r_ref[...].astype(jnp.float32)
        if activation == "relu":
            y = jnp.maximum(y, 0.0)
        elif activation == "sigmoid":
            y = _stable_sigmoid(y)
        o_ref[...] = y.astype(o_ref.dtype)


def fused_matmul(x, w, scale, bias, activation="none", residual=None,
                 out_dtype=jnp.bfloat16):
    """act((x @ w) * scale + bias [+ residual]); x:[M,K], w:[K,N], scale/bias:[N]."""
    M, K = x.shape
    N = w.shape[1]

    # K: full contraction depth in one step (a block equal to the full dim is exempt
    # from the 128-lane divisibility rule) -> no K padding, no k revisits.
    if K <= 8192:
        tk, Kp = K, K
    else:
        tk = _largest_divisor(K, 2048, 128) or 2048
        Kp = _pad_to(K, tk)

    # N: every Cout in this model is a multiple of 128.
    tn = _largest_divisor(N, 512, 128)
    if tn is None:
        tn = min(512, _pad_to(N, 128))
    Np = _pad_to(N, tn)

    # M: prefer a multiple-of-16 divisor (dense bf16 sublane packing, no activation /
    # residual padding copy); otherwise pad minimally.
    tm = _largest_divisor(M, 512, 16)
    if tm is not None:
        Mp = M
    else:
        Mp = _pad_to(M, 16)
        if Mp <= 512:
            tm = Mp
        else:
            tm = 256
            Mp = _pad_to(M, tm)

    # Keep >= 2 independent output tiles so both v7x TensorCores get work.
    while (Mp // tm) * (Np // tn) < 2:
        if tn >= 256 and (tn // 2) % 128 == 0 and Np % (tn // 2) == 0:
            tn //= 2
        elif tm >= 32 and (tm // 2) % 16 == 0 and Mp % (tm // 2) == 0:
            tm //= 2
        else:
            break

    x = x.astype(jnp.bfloat16)
    w = w.astype(jnp.bfloat16)
    xp = x if (Mp == M and Kp == K) else jnp.pad(x, ((0, Mp - M), (0, Kp - K)))
    wp = w if (Kp == K and Np == N) else jnp.pad(w, ((0, Kp - K), (0, Np - N)))
    sp = scale.astype(jnp.float32)
    bp = bias.astype(jnp.float32)
    if Np != N:
        sp = jnp.pad(sp, (0, Np - N))
        bp = jnp.pad(bp, (0, Np - N))
    sp = sp.reshape(1, Np)
    bp = bp.reshape(1, Np)

    has_res = residual is not None
    in_specs = [
        pl.BlockSpec((tm, tk), lambda i, j, k: (i, k)),
        pl.BlockSpec((tk, tn), lambda i, j, k: (k, j)),
        pl.BlockSpec((1, tn), lambda i, j, k: (0, j)),
        pl.BlockSpec((1, tn), lambda i, j, k: (0, j)),
    ]
    args = [xp, wp, sp, bp]
    if has_res:
        r = residual.astype(jnp.bfloat16)
        rp = r if (Mp == M and Np == N) else jnp.pad(r, ((0, Mp - M), (0, Np - N)))
        in_specs.append(pl.BlockSpec((tm, tn), lambda i, j, k: (i, j)))
        args.append(rp)

    kernel = functools.partial(_fused_matmul_kernel, activation=activation,
                               has_res=has_res)
    out = pl.pallas_call(
        kernel,
        out_shape=jax.ShapeDtypeStruct((Mp, Np), out_dtype),
        grid_spec=pltpu.PrefetchScalarGridSpec(
            num_scalar_prefetch=0,
            grid=(Mp // tm, Np // tn, Kp // tk),
            in_specs=in_specs,
            out_specs=pl.BlockSpec((tm, tn), lambda i, j, k: (i, j)),
            scratch_shapes=[pltpu.VMEM((tm, tn), jnp.float32)],
        ),
        compiler_params=pltpu.CompilerParams(
            dimension_semantics=("parallel", "parallel", "arbitrary"),
            vmem_limit_bytes=VMEM_LIMIT),
    )(*args)
    if Mp == M and Np == N:
        return out
    return out[:M, :N]


# --------------------------------------------------------------------------------------
# 3x3 stride-1 conv + BN + ReLU without HBM im2col: tap-shifted matmuls over the
# flattened padded image; one grid step per (batch, row-tile).
# --------------------------------------------------------------------------------------

def _conv3x3_kernel(x_ref, w_ref, s_ref, b_ref, o_ref, acc_ref, *, tm, cin, wrow):
    r0 = pl.multiple_of(pl.program_id(1) * tm, 16)
    for dh in range(3):
        for dw in range(3):
            tap = dh * 3 + dw
            off = dh * wrow + dw  # row shift of tap (dh,dw) in the flattened image
            contrib = jnp.dot(x_ref[0, pl.ds(r0 + off, tm), :],
                              w_ref[pl.ds(tap * cin, cin), :],
                              preferred_element_type=jnp.float32)
            if tap == 0:
                acc_ref[...] = contrib
            else:
                acc_ref[...] += contrib
    y = jnp.maximum(acc_ref[...] * s_ref[...] + b_ref[...], 0.0)
    o_ref[0, :, :] = y.astype(o_ref.dtype)


def conv3x3_s1_bn_relu(x, w, scale, shift):
    """3x3, stride 1, pad 1 conv + folded BN + ReLU on NHWC. x:[N,H,W,Cin], w:[3,3,Cin,Cout]."""
    N, H, W, Cin = x.shape
    Cout = w.shape[-1]
    Ho, Wo = H, W
    Hp = H + 2
    Wrow = _pad_to(W + 2, 8)  # row pitch aligned so dh*Wrow tap shifts stay aligned

    xp = jnp.pad(x.astype(jnp.bfloat16),
                 ((0, 0), (1, 1), (1, 1 + Wrow - (W + 2)), (0, 0)))
    xflat = xp.reshape(N, Hp * Wrow, Cin)

    R_out = Ho * Wrow                     # outputs computed on the padded-pitch grid
    tm = min(256, _pad_to(R_out, 16))
    R_pad = _pad_to(R_out, tm)
    n_tiles = R_pad // tm
    Rx_pad = _pad_to(R_pad + 2 * Wrow + 2, 8)   # max tap shift is 2*Wrow + 2
    xflat = jnp.pad(xflat, ((0, 0), (0, Rx_pad - Hp * Wrow), (0, 0)))

    w9 = w.astype(jnp.bfloat16).reshape(9 * Cin, Cout)
    sp = scale.astype(jnp.float32).reshape(1, Cout)
    bp = shift.astype(jnp.float32).reshape(1, Cout)

    kernel = functools.partial(_conv3x3_kernel, tm=tm, cin=Cin, wrow=Wrow)
    out = pl.pallas_call(
        kernel,
        out_shape=jax.ShapeDtypeStruct((N, R_pad, Cout), jnp.bfloat16),
        grid_spec=pltpu.PrefetchScalarGridSpec(
            num_scalar_prefetch=0,
            grid=(N, n_tiles),
            in_specs=[
                # image slab indexed only by n -> not re-DMA'd across row tiles
                pl.BlockSpec((1, Rx_pad, Cin), lambda n, t: (n, 0, 0)),
                pl.BlockSpec((9 * Cin, Cout), lambda n, t: (0, 0)),
                pl.BlockSpec((1, Cout), lambda n, t: (0, 0)),
                pl.BlockSpec((1, Cout), lambda n, t: (0, 0)),
            ],
            out_specs=pl.BlockSpec((1, tm, Cout), lambda n, t: (n, t, 0)),
            scratch_shapes=[pltpu.VMEM((tm, Cout), jnp.float32)],
        ),
        compiler_params=pltpu.CompilerParams(
            dimension_semantics=("parallel", "parallel"),
            vmem_limit_bytes=VMEM_LIMIT),
    )(xflat, w9, sp, bp)
    # drop the padded-pitch garbage columns per row and any row padding
    return out[:, :R_out, :].reshape(N, Ho, Wrow, Cout)[:, :, :Wo, :]


# --------------------------------------------------------------------------------------
# MaxPool 3x3 / stride 2 / pad 1: phase-decomposed (even/odd rows & cols), 9-way max
# --------------------------------------------------------------------------------------

def _maxpool_kernel(p00_ref, p01_ref, p10_ref, p11_ref, o_ref):
    refs = ((p00_ref, p01_ref), (p10_ref, p11_ref))
    Ho, Wo = o_ref.shape[1], o_ref.shape[2]
    m = None
    for dh in range(3):
        for dw in range(3):
            r = refs[dh % 2][dw % 2]
            v = r[:, pl.ds(dh // 2, Ho), pl.ds(dw // 2, Wo), :]
            m = v if m is None else jnp.maximum(m, v)
    o_ref[...] = m


def maxpool_3x3_s2_p1(x):
    N, H, W, C = x.shape
    Ho = (H - 1) // 2 + 1
    Wo = (W - 1) // 2 + 1
    xp = jnp.pad(x, ((0, 0), (1, 1), (1, 1), (0, 0)), constant_values=NEG)
    phases = []
    for a in range(2):
        for b in range(2):
            p = xp[:, a::2, b::2, :]
            phases.append(jnp.pad(
                p,
                ((0, 0), (0, Ho + 1 - p.shape[1]), (0, Wo + 1 - p.shape[2]), (0, 0)),
                constant_values=NEG))
    out = pl.pallas_call(
        _maxpool_kernel,
        out_shape=jax.ShapeDtypeStruct((N, Ho, Wo, C), x.dtype),
        grid=(N,),
        in_specs=[pl.BlockSpec((1, Ho + 1, Wo + 1, C), lambda n: (n, 0, 0, 0))] * 4,
        out_specs=pl.BlockSpec((1, Ho, Wo, C), lambda n: (n, 0, 0, 0)),
        compiler_params=pltpu.CompilerParams(
            dimension_semantics=("parallel",),
            vmem_limit_bytes=VMEM_LIMIT),
    )(*phases)
    return out


# --------------------------------------------------------------------------------------
# Head: global avg-pool + Linear + Sigmoid in one kernel
# --------------------------------------------------------------------------------------

def _head_kernel(x_ref, w_ref, b_ref, o_ref):
    pooled = jnp.mean(x_ref[...].astype(jnp.float32), axis=1)   # global average pool
    y = jnp.dot(pooled.astype(jnp.bfloat16), w_ref[...],
                preferred_element_type=jnp.float32) + b_ref[...]
    o_ref[...] = _stable_sigmoid(y)


def head(x, fc_w, fc_b, class_num):
    N, H, W, C = x.shape
    Np = fc_w.shape[1]          # pre-padded to a multiple of 128 at init
    x3 = x.reshape(N, H * W, C)
    out = pl.pallas_call(
        _head_kernel,
        out_shape=jax.ShapeDtypeStruct((N, Np), jnp.float32),
        grid=(1,),
        in_specs=[pl.BlockSpec((N, H * W, C), lambda i: (0, 0, 0)),
                  pl.BlockSpec((C, Np), lambda i: (0, 0)),
                  pl.BlockSpec((1, Np), lambda i: (0, 0))],
        out_specs=pl.BlockSpec((N, Np), lambda i: (0, 0)),
        compiler_params=pltpu.CompilerParams(vmem_limit_bytes=VMEM_LIMIT),
    )(x3, fc_w, fc_b.reshape(1, Np))
    return out[:, :class_num]


# --------------------------------------------------------------------------------------
# Conv wrappers
# --------------------------------------------------------------------------------------

def conv1x1_bn(x, w, scale, shift, activation="relu", residual=None):
    """1x1 conv + folded BN (+ optional fused residual add) — no im2col."""
    N, H, W, Cin = x.shape
    Cout = w.shape[-1]
    xm = x.reshape(N * H * W, Cin)
    rm = residual.reshape(N * H * W, Cout) if residual is not None else None
    y = fused_matmul(xm, w.reshape(Cin, Cout), scale, shift,
                     activation=activation, residual=rm)
    return y.reshape(N, H, W, Cout)


def conv_bn_im2col(x, w, scale, shift, stride, pad, activation="relu"):
    """General conv via im2col + fused matmul (only the 7x7 stem and the three
    stride-2 3x3 convs)."""
    N, H, W, Cin = x.shape
    kh, kw, _, Cout = w.shape
    Ho = (H + 2 * pad - kh) // stride + 1
    Wo = (W + 2 * pad - kw) // stride + 1
    xp = jnp.pad(x, ((0, 0), (pad, pad), (pad, pad), (0, 0)))
    cols = [xp[:, i:i + stride * Ho:stride, j:j + stride * Wo:stride, :]
            for i in range(kh) for j in range(kw)]
    patches = jnp.stack(cols, axis=3)                     # [N, Ho, Wo, kh*kw, Cin]
    xmat = patches.reshape(N * Ho * Wo, kh * kw * Cin)
    wmat = w.reshape(kh * kw * Cin, Cout)
    y = fused_matmul(xmat, wmat, scale, shift, activation=activation)
    return y.reshape(N, Ho, Wo, Cout)


# --------------------------------------------------------------------------------------
# ResNet-50 parameters (synthetic, deterministic) and forward
# --------------------------------------------------------------------------------------

def _cp(c):
    """Pad narrow feature-channel dims to 128 lanes (dense vregs / fuller MXU K)."""
    return max(c, 128)


def _make_conv(key, kh, kw, cin, cout, cin_p=None, cout_p=None):
    cin_p = cin if cin_p is None else cin_p
    cout_p = cout if cout_p is None else cout_p
    std = (2.0 / (kh * kw * cin)) ** 0.5
    w = jax.random.normal(key, (kh, kw, cin, cout), jnp.float32) * std
    if cin_p != cin or cout_p != cout:
        w = jnp.pad(w, ((0, 0), (0, 0), (0, cin_p - cin), (0, cout_p - cout)))
    return w.astype(jnp.bfloat16)


def _make_bn(cout, cout_p=None, eps=1e-5):
    cout_p = cout if cout_p is None else cout_p
    gamma = jnp.ones((cout,), jnp.float32)
    beta = jnp.zeros((cout,), jnp.float32)
    mean = jnp.zeros((cout,), jnp.float32)
    var = jnp.ones((cout,), jnp.float32)
    scale = gamma / jnp.sqrt(var + eps)
    shift = beta - mean * scale
    if cout_p != cout:
        scale = jnp.pad(scale, (0, cout_p - cout))
        shift = jnp.pad(shift, (0, cout_p - cout))
    return scale, shift


def init_rmin_params(key, class_num=1):
    keys = iter(jax.random.split(key, 256))
    params = {
        "conv1": _make_conv(next(keys), 7, 7, 3, 64, cin_p=3, cout_p=_cp(64)),
        "bn1": _make_bn(64, _cp(64)),
    }
    inplanes = 64
    layers = []
    for planes, nblocks, stride in [(64, 3, 1), (128, 4, 2), (256, 6, 2), (512, 3, 2)]:
        blocks = []
        for b in range(nblocks):
            s = stride if b == 0 else 1
            blk = {
                "conv1": _make_conv(next(keys), 1, 1, inplanes, planes,
                                    cin_p=_cp(inplanes), cout_p=_cp(planes)),
                "bn1": _make_bn(planes, _cp(planes)),
                "conv2": _make_conv(next(keys), 3, 3, planes, planes,
                                    cin_p=_cp(planes), cout_p=_cp(planes)),
                "bn2": _make_bn(planes, _cp(planes)),
                "conv3": _make_conv(next(keys), 1, 1, planes, planes * 4,
                                    cin_p=_cp(planes), cout_p=planes * 4),
                "bn3": _make_bn(planes * 4),
                "stride": s,
                "downsample": None,
            }
            if s != 1 or inplanes != planes * 4:
                blk["downsample"] = (
                    _make_conv(next(keys), 1, 1, inplanes, planes * 4,
                               cin_p=_cp(inplanes), cout_p=planes * 4),
                    _make_bn(planes * 4))
            blocks.append(blk)
            inplanes = planes * 4
        layers.append(blocks)
    params["layers"] = layers
    cnp = _pad_to(class_num, 128)
    fc_w = jax.random.normal(next(keys), (2048, class_num), jnp.float32) * 0.02
    fc_w = jnp.pad(fc_w, ((0, 0), (0, cnp - class_num))).astype(jnp.bfloat16)
    fc_b = jnp.zeros((cnp,), jnp.float32)
    params["fc"] = (fc_w, fc_b, class_num)
    return params


def rmin_forward(params, image_nchw, target=None):
    x = jnp.transpose(image_nchw, (0, 2, 3, 1)).astype(jnp.bfloat16)  # NCHW -> NHWC, bf16
    s, b = params["bn1"]
    x = conv_bn_im2col(x, params["conv1"], s, b, stride=2, pad=3, activation="relu")
    x = maxpool_3x3_s2_p1(x)
    for blocks in params["layers"]:
        for blk in blocks:
            identity = x
            s1, b1 = blk["bn1"]
            s2, b2 = blk["bn2"]
            s3, b3 = blk["bn3"]
            st = blk["stride"]
            out = conv1x1_bn(x, blk["conv1"], s1, b1, activation="relu")
            if st == 1:
                out = conv3x3_s1_bn_relu(out, blk["conv2"], s2, b2)
            else:
                out = conv_bn_im2col(out, blk["conv2"], s2, b2, stride=st, pad=1,
                                     activation="relu")
            if blk["downsample"] is not None:
                dw, (ds, db) = blk["downsample"]
                xin = x if st == 1 else x[:, ::st, ::st, :]   # 1x1 stride-s == subsample
                identity = conv1x1_bn(xin, dw, ds, db, activation="none")
            # conv3 + BN + residual add + ReLU fused into one matmul epilogue
            x = conv1x1_bn(out, blk["conv3"], s3, b3, activation="relu",
                           residual=identity)
    fc_w, fc_b, class_num = params["fc"]
    ans = head(x, fc_w, fc_b, class_num)
    dict_loss = None  # TODO(synk): BCE loss branch (when a target is supplied) not implemented
    return ans, dict_loss


if __name__ == "__main__":
    key = jax.random.PRNGKey(0)
    pkey, xkey = jax.random.split(key)
    params = init_rmin_params(pkey, class_num=1)
    # NCHW, like the PyTorch module's conv input; 32x32 keeps the /32 downsampling valid.
    x = jax.random.normal(xkey, (2, 3, 32, 32), jnp.float32)
    ans, dict_loss = rmin_forward(params, x)
    ans = jax.block_until_ready(ans)
    assert ans.shape == (2, 1)
    assert bool(jnp.all(jnp.isfinite(ans)))
    assert bool(jnp.all((ans >= 0.0) & (ans <= 1.0)))  # sigmoid output
    print("KERNEL_OK")
</pallas_src>

<mosaic_0001>
module attributes {stable_mosaic.version = 11 : i64} {
  func.func @_fused_matmul_kernel(%arg0: i32, %arg1: i32, %arg2: i32, %arg3: memref<256x147xbf16, #tpu.memory_space<vmem>>, %arg4: memref<147x128xbf16, #tpu.memory_space<vmem>>, %arg5: memref<1x128xf32, #tpu.memory_space<vmem>>, %arg6: memref<1x128xf32, #tpu.memory_space<vmem>>, %arg7: memref<256x128xbf16, #tpu.memory_space<vmem>>, %arg8: memref<256x128xf32, #tpu.memory_space<vmem>>) attributes {dimension_semantics = [#tpu.dimension_semantics<parallel>, #tpu.dimension_semantics<parallel>, #tpu.dimension_semantics<arbitrary>], iteration_bounds = array<i64: 2, 1, 1>, scalar_prefetch = 0 : i64, scratch_operands = 1 : i64, tpu.core_type = #tpu.core_type<tc>, window_params = [{transform_indices = @transform_0, window_bounds = array<i64: 256, 147>}, {transform_indices = @transform_1, window_bounds = array<i64: 147, 128>}, {transform_indices = @transform_2, window_bounds = array<i64: 1, 128>}, {transform_indices = @transform_3, window_bounds = array<i64: 1, 128>}, {transform_indices = @transform_4, window_bounds = array<i64: 256, 128>}]} {
    %c0_i32 = arith.constant 0 : i32
    %0 = arith.cmpi eq, %arg2, %c0_i32 : i32
    %1 = arith.extui %0 : i1 to i32
    %c0_i32_0 = arith.constant 0 : i32
    %2 = arith.cmpi ne, %1, %c0_i32_0 : i32
    scf.if %2 {
      %cst_10 = arith.constant 0.000000e+00 : f32
      %12 = vector.broadcast %cst_10 : f32 to vector<256x128xf32>
      %c0_11 = arith.constant 0 : index
      %c0_12 = arith.constant 0 : index
      %13 = vector.load %arg8[%c0_11, %c0_12] : memref<256x128xf32, #tpu.memory_space<vmem>>, vector<256x128xf32>
      tpu.vector_store %arg8[%c0_11, %c0_12], %12 {strides = array<i32>} : memref<256x128xf32, #tpu.memory_space<vmem>>, vector<256x128xf32>,
    } else {
    }
    %c0 = arith.constant 0 : index
    %c0_1 = arith.constant 0 : index
    %3 = vector.load %arg8[%c0, %c0_1] : memref<256x128xf32, #tpu.memory_space<vmem>>, vector<256x128xf32>
    %c0_2 = arith.constant 0 : index
    %c0_3 = arith.constant 0 : index
    %4 = vector.load %arg3[%c0_2, %c0_3] : memref<256x147xbf16, #tpu.memory_space<vmem>>, vector<256x147xbf16>
    %c0_4 = arith.constant 0 : index
    %c0_5 = arith.constant 0 : index
    %5 = vector.load %arg4[%c0_4, %c0_5] : memref<147x128xbf16, #tpu.memory_space<vmem>>, vector<147x128xbf16>
    %cst = arith.constant dense<0.000000e+00> : vector<256x128xf32>
    %6 = tpu.matmul %4, %5, %cst {dimension_numbers = #tpu.dot_dimension_numbers<[1], [0], [0], [1], [0, 0, 1, 1], [], []>} : vector<256x147xbf16>, vector<147x128xbf16>, vector<256x128xf32> -> vector<256x128xf32>
    %7 = arith.addf %3, %6 : vector<256x128xf32>
    %c0_6 = arith.constant 0 : index
    %c0_7 = arith.constant 0 : index
    %8 = vector.load %arg8[%c0_6, %c0_7] : memref<256x128xf32, #tpu.memory_space<vmem>>, vector<256x128xf32>
    tpu.vector_store %arg8[%c0_6, %c0_7], %7 {strides = array<i32>} : memref<256x128xf32, #tpu.memory_space<vmem>>, vector<256x128xf32>,
    %c0_i32_8 = arith.constant 0 : i32
    %9 = arith.cmpi eq, %arg2, %c0_i32_8 : i32
    %10 = arith.extui %9 : i1 to i32
    %c0_i32_9 = arith.constant 0 : i32
    %11 = arith.cmpi ne, %10, %c0_i32_9 : i32
    scf.if %11 {
      %c0_10 = arith.constant 0 : index
      %c0_11 = arith.constant 0 : index
      %12 = vector.load %arg8[%c0_10, %c0_11] : memref<256x128xf32, #tpu.memory_space<vmem>>, vector<256x128xf32>
      %c0_12 = arith.constant 0 : index
      %c0_13 = arith.constant 0 : index
      %13 = vector.load %arg5[%c0_12, %c0_13] : memref<1x128xf32, #tpu.memory_space<vmem>>, vector<1x128xf32>
      %14 = vector.broadcast %13 : vector<1x128xf32> to vector<256x128xf32>
      %15 = arith.mulf %12, %14 : vector<256x128xf32>
      %c0_14 = arith.constant 0 : index
      %c0_15 = arith.constant 0 : index
      %16 = vector.load %arg6[%c0_14, %c0_15] : memref<1x128xf32, #tpu.memory_space<vmem>>, vector<1x128xf32>
      %17 = vector.broadcast %16 : vector<1x128xf32> to vector<256x128xf32>
      %18 = arith.addf %15, %17 : vector<256x128xf32>
      %cst_16 = arith.constant 0.000000e+00 : f32
      %19 = vector.broadcast %cst_16 : f32 to vector<256x128xf32>
      %20 = arith.maximumf %18, %19 : vector<256x128xf32>
      %21 = arith.truncf %20 : vector<256x128xf32> to vector<256x128xbf16>
      %c0_17 = arith.constant 0 : index
      %c0_18 = arith.constant 0 : index
      %22 = vector.load %arg7[%c0_17, %c0_18] : memref<256x128xbf16, #tpu.memory_space<vmem>>, vector<256x128xbf16>
      tpu.vector_store %arg7[%c0_17, %c0_18], %21 {strides = array<i32>} : memref<256x128xbf16, #tpu.memory_space<vmem>>, vector<256x128xbf16>,
    } else {
    }
    return
  }
  func.func @transform_0(%arg0: i32, %arg1: i32, %arg2: i32) -> (i32, i32) {
    %c0_i32 = arith.constant 0 : i32
    return %arg0, %arg2 : i32, i32
  }
  func.func @transform_1(%arg0: i32, %arg1: i32, %arg2: i32) -> (i32, i32) {
    %c0_i32 = arith.constant 0 : i32
    return %arg2, %arg1 : i32, i32
  }
  func.func @transform_2(%arg0: i32, %arg1: i32, %arg2: i32) -> (i32, i32) {
    %c0_i32 = arith.constant 0 : i32
    %c0_i32_0 = arith.constant 0 : i32
    return %c0_i32, %arg1 : i32, i32
  }
  func.func @transform_3(%arg0: i32, %arg1: i32, %arg2: i32) -> (i32, i32) {
    %c0_i32 = arith.constant 0 : i32
    %c0_i32_0 = arith.constant 0 : i32
    return %c0_i32, %arg1 : i32, i32
  }
  func.func @transform_4(%arg0: i32, %arg1: i32, %arg2: i32) -> (i32, i32) {
    %c0_i32 = arith.constant 0 : i32
    return %arg0, %arg1 : i32, i32
  }
}

</mosaic_0001>

<llo_original>
// kernel: tpu_custom_call.1
$region0: #{tpu_custom_call.1}
  #allocation0 [shape = 'u32[]', space=smem, size = 0x4, offset = 0x4, fixed_abs, tag = 'smem constant byte address 0x4 - core index']
  #allocation1 [shape = 'u32[144,128]{1,0:T(1,128)}', space=vmem, size = 0x12000, scoped, tag = 'internal scratch']
  #allocation2 [shape = 'f32[256,128]{1,0:T(8,128)}', space=vmem, size = 0x20000, scoped, tag = 'scratch operand']
  %s0 = inlined_call_operand.vmem [shape: bf16[512,147], index: 0, kind: input, shape index: {}]
  %s1 = inlined_call_operand.vmem [shape: bf16[147,128], index: 1, kind: input, shape index: {}]
  %s2 = inlined_call_operand.vmem [shape: f32[1,128], index: 2, kind: input, shape index: {}]
  %s3 = inlined_call_operand.vmem [shape: f32[1,128], index: 3, kind: input, shape index: {}]
  %s4 = inlined_call_operand.hbm [shape: bf16[512,128], index: 4, kind: output, shape index: {}]
  %s5 = sld [smem:[#allocation0]]
  $region57: #{tpu_custom_call.1} parent=0
    _
  %s7 = ssub.s32 1, %s5
  %s8 = scalar_select 0, %s7, %s5
  $region1: #{tpu_custom_call.1} parent=0
    #allocation3 [shape = 'u8[131072]{0}', space=vmem, size = 0x20000, scoped, tag = 'output window, operand 0']
    #allocation4 [shape = 's32[2]{0}', space=sflag, size = 0x8, scoped, tag = 'scoped memory for tpu_custom_call.1']
    %9 = vsyncpa [#allocation4], 0
    %s10 = scalar_lea.sflag [#allocation4], 1
    %11 = vsyncpa %s10, 0
    loop: start=0, step=1, limit=4
    $region2: #{tpu_custom_call.1} parent=1 // loop_pre_header
      _
    $region3: #{tpu_custom_call.1} parent=1 // loop_header
      %s13 = sphi 0, %s17
      %p14 = scmp.ge.s32.totalorder %s13, 4
      %s20 = sphi 0, %s39
      %s21 = sphi 0, %s35
      %s22 = sphi 0, %s31
      %s23 = sphi 0, %s20
      %s24 = sphi 0, %s21
      %s25 = sphi 0, %s22
      %s26 = sphi 0, %s23
      %s27 = sphi 0, %s24
      %s28 = sphi 0, %s25
      %s44 = sphi 0, %s46
      %s47 = sphi 0, %s44
      %s48 = sphi 0, %s47
      %s64 = sphi 0, %s48
      %s72 = sphi 0, %s74
      %s75 = sphi 0, %s72
      %s76 = sphi 0, %s75
      %s92 = sphi 0, %s76
      %s98 = sphi 0, %s100
      %s101 = sphi 0, %s98
      %s102 = sphi 0, %s101
      %s118 = sphi 0, %s102
      %s124 = sphi 0, %s126
      %s127 = sphi 0, %s124
      %s128 = sphi 0, %s127
      %s144 = sphi 0, %s128
      %s152 = sphi 0, %s154
      %s155 = sphi 0, %s152
      %s156 = sphi 0, %s155
      %s172 = sphi 0, %s156
    $region4: #{tpu_custom_call.1} parent=1 // loop_header_branch
      %16 = sbr.rel (%p14) target = $region8
    $region5: #{tpu_custom_call.1} parent=1 // loop_body
      %s18 = ssub.s32 %s13, 1
      %s19 = ssub.s32 %s13, 2
      %s29 = sadd.s32 1, %s22
      %p30 = scmp.ge.s32.totalorder %s29, 1
      %s31 = scalar_select %p30, 0, %s29
      %s32 = sadd.s32 1, %s21
      %s33 = scalar_select %p30, %s32, %s21
      %p34 = scmp.ge.s32.totalorder %s33, 1
      %s35 = scalar_select %p34, 0, %s33
      %s36 = sadd.s32 1, %s20
      %s37 = scalar_select %p34, %s36, %s20
      %p38 = scmp.ge.s32.totalorder %s37, 2
      %s39 = scalar_select %p38, 0, %s37
      %s40 = ssub.s32 %s20, %s39
      %s41 = ssub.s32 %s22, %s31
      %s42 = sor.u32 %s40, %s41
      %p43 = scmp.eq.s32.totalorder %s42, 0
      %s45 = sadd.s32 %s44, 1
      %s46 = scalar_select %p43, %s44, %s45
      %p49 = pneg %p43
      %p50 = scmp.eq.s32.totalorder %s13, 1
      %p51 = por %p49, %p50
      %p52 = scmp.ne.s32.totalorder %s44, %s47
      %p53 = scmp.eq.s32.totalorder %s13, 0
      %p54 = por %p52, %p53
      %p55 = scmp.ne.s32.totalorder %s44, %s47
      %p56 = scmp.eq.s32.totalorder %s18, 1
      %p57 = por %p55, %p56
      %p58 = scmp.ne.s32.totalorder %s47, %s48
      %p59 = scmp.eq.s32.totalorder %s18, 0
      %p60 = por %p58, %p59
      %p61 = scmp.ne.s32.totalorder %s47, %s48
      %p62 = scmp.eq.s32.totalorder %s19, 1
      %p63 = por %p61, %p62
      %p65 = scmp.ne.s32.totalorder %s48, %s64
      %p66 = scmp.eq.s32.totalorder %s19, 0
      %p67 = por %p65, %p66
      %s68 = ssub.s32 %s22, %s31
      %s69 = ssub.s32 %s21, %s35
      %s70 = sor.u32 %s68, %s69
      %p71 = scmp.eq.s32.totalorder %s70, 0
      %s73 = sadd.s32 %s72, 1
      %s74 = scalar_select %p71, %s72, %s73
      %p77 = pneg %p71
      %p78 = scmp.eq.s32.totalorder %s13, 1
      %p79 = por %p77, %p78
      %p80 = scmp.ne.s32.totalorder %s72, %s75
      %p81 = scmp.eq.s32.totalorder %s13, 0
      %p82 = por %p80, %p81
      %p83 = scmp.ne.s32.totalorder %s72, %s75
      %p84 = scmp.eq.s32.totalorder %s18, 1
      %p85 = por %p83, %p84
      %p86 = scmp.ne.s32.totalorder %s75, %s76
      %p87 = scmp.eq.s32.totalorder %s18, 0
      %p88 = por %p86, %p87
      %p89 = scmp.ne.s32.totalorder %s75, %s76
      %p90 = scmp.eq.s32.totalorder %s19, 1
      %p91 = por %p89, %p90
      %p93 = scmp.ne.s32.totalorder %s76, %s92
      %p94 = scmp.eq.s32.totalorder %s19, 0
      %p95 = por %p93, %p94
      %s96 = ssub.s32 %s21, %s35
      %p97 = scmp.eq.s32.totalorder %s96, 0
      %s99 = sadd.s32 %s98, 1
      %s100 = scalar_select %p97, %s98, %s99
      %p103 = pneg %p97
      %p104 = scmp.eq.s32.totalorder %s13, 1
      %p105 = por %p103, %p104
      %p106 = scmp.ne.s32.totalorder %s98, %s101
      %p107 = scmp.eq.s32.totalorder %s13, 0
      %p108 = por %p106, %p107
      %p109 = scmp.ne.s32.totalorder %s98, %s101
      %p110 = scmp.eq.s32.totalorder %s18, 1
      %p111 = por %p109, %p110
      %p112 = scmp.ne.s32.totalorder %s101, %s102
      %p113 = scmp.eq.s32.totalorder %s18, 0
      %p114 = por %p112, %p113
      %p115 = scmp.ne.s32.totalorder %s101, %s102
      %p116 = scmp.eq.s32.totalorder %s19, 1
      %p117 = por %p115, %p116
      %p119 = scmp.ne.s32.totalorder %s102, %s118
      %p120 = scmp.eq.s32.totalorder %s19, 0
      %p121 = por %p119, %p120
      %s122 = ssub.s32 %s21, %s35
      %p123 = scmp.eq.s32.totalorder %s122, 0
      %s125 = sadd.s32 %s124, 1
      %s126 = scalar_select %p123, %s124, %s125
      %p129 = pneg %p123
      %p130 = scmp.eq.s32.totalorder %s13, 1
      %p131 = por %p129, %p130
      %p132 = scmp.ne.s32.totalorder %s124, %s127
      %p133 = scmp.eq.s32.totalorder %s13, 0
      %p134 = por %p132, %p133
      %p135 = scmp.ne.s32.totalorder %s124, %s127
      %p136 = scmp.eq.s32.totalorder %s18, 1
      %p137 = por %p135, %p136
      %p138 = scmp.ne.s32.totalorder %s127, %s128
      %p139 = scmp.eq.s32.totalorder %s18, 0
      %p140 = por %p138, %p139
      %p141 = scmp.ne.s32.totalorder %s127, %s128
      %p142 = scmp.eq.s32.totalorder %s19, 1
      %p143 = por %p141, %p142
      %p145 = scmp.ne.s32.totalorder %s128, %s144
      %p146 = scmp.eq.s32.totalorder %s19, 0
      %p147 = por %p145, %p146
      %s148 = ssub.s32 %s20, %s39
      %s149 = ssub.s32 %s21, %s35
      %s150 = sor.u32 %s148, %s149
      %p151 = scmp.eq.s32.totalorder %s150, 0
      %s153 = sadd.s32 %s152, 1
      %s154 = scalar_select %p151, %s152, %s153
      %p157 = pneg %p151
      %p158 = scmp.eq.s32.totalorder %s13, 1
      %p159 = por %p157, %p158
      %p160 = scmp.ne.s32.totalorder %s152, %s155
      %p161 = scmp.eq.s32.totalorder %s13, 0
      %p162 = por %p160, %p161
      %p163 = scmp.ne.s32.totalorder %s152, %s155
      %p164 = scmp.eq.s32.totalorder %s18, 1
      %p165 = por %p163, %p164
      %p166 = scmp.ne.s32.totalorder %s155, %s156
      %p167 = scmp.eq.s32.totalorder %s18, 0
      %p168 = por %p166, %p167
      %p169 = scmp.ne.s32.totalorder %s155, %s156
      %p170 = scmp.eq.s32.totalorder %s19, 1
      %p171 = por %p169, %p170
      %p173 = scmp.ne.s32.totalorder %s156, %s172
      %p174 = scmp.eq.s32.totalorder %s19, 0
      %p175 = por %p173, %p174
      %p176 = scmp.le.s32.totalorder 1, %s13
      %p177 = scmp.lt.s32.totalorder %s13, 3
      %p178 = pnand %p176, %p177
      %p179 = pneg %p178
      // Predicated region
      $region9: #{tpu_custom_call.1} parent=5 // pred_check
        _
      $region10: #{tpu_custom_call.1} parent=5 // pred_check_branch
        %181 = sbr.rel (%p178) target = $region12
      $region11: #{tpu_custom_call.1} parent=5 // pred_region
        %s182 = ssub.s32 %s13, 1
        // Predicated region
        $region13: #{tpu_custom_call.1} parent=11 // pred_check
          %p183 = pneg %p88
        $region14: #{tpu_custom_call.1} parent=11 // pred_check_branch
          %185 = sbr.rel (%p183) target = $region16
        $region15: #{tpu_custom_call.1} parent=11 // pred_region
          %s186 = smul.u32 19, %s25
          %p187 = scmp.lt.s32.totalorder %s186, 18
          %s188 = scalar_select %p187, %s186, 18
          %p189 = scmp.lt.s32.totalorder %s24, 0
          %s190 = scalar_select %p189, %s24, 0
          %s191 = sadd.s32 %s190, %s188
          %s192 = smul.addr %s191, 4
          %s193 = scalar_lea.vmem %s1, %s192
          %s194 = smul.u32 19, %s25
        $region16: #{tpu_custom_call.1} parent=11 // pred_fallthru
          _
        // Predicated region
        $region17: #{tpu_custom_call.1} parent=11 // pred_check
          %p195 = pneg %p114
        $region18: #{tpu_custom_call.1} parent=11 // pred_check_branch
          %197 = sbr.rel (%p195) target = $region20
        $region19: #{tpu_custom_call.1} parent=11 // pred_region
          %p198 = scmp.lt.s32.totalorder %s24, 0
          %s199 = scalar_select %p198, %s24, 0
          %s200 = scalar_lea.vmem %s2, %s199
        $region20: #{tpu_custom_call.1} parent=11 // pred_fallthru
          _
        // Predicated region
        $region21: #{tpu_custom_call.1} parent=11 // pred_check
          %p201 = pneg %p140
        $region22: #{tpu_custom_call.1} parent=11 // pred_check_branch
          %203 = sbr.rel (%p201) target = $region24
        $region23: #{tpu_custom_call.1} parent=11 // pred_region
          %p204 = scmp.lt.s32.totalorder %s24, 0
          %s205 = scalar_select %p204, %s24, 0
          %s206 = scalar_lea.vmem %s3, %s205
        $region24: #{tpu_custom_call.1} parent=11 // pred_fallthru
          _
      $region12: #{tpu_custom_call.1} parent=5 // pred_fallthru
        _
      %p207 = scmp.lt.s32.totalorder %s13, 2
      // Predicated region
      $region25: #{tpu_custom_call.1} parent=5 // pred_check
        %p208 = pneg %p207
      $region26: #{tpu_custom_call.1} parent=5 // pred_check_branch
        %210 = sbr.rel (%p208) target = $region28
      $region27: #{tpu_custom_call.1} parent=5 // pred_region
        // Predicated region
        $region29: #{tpu_custom_call.1} parent=27 // pred_check
          %p211 = pneg %p54
        $region30: #{tpu_custom_call.1} parent=27 // pred_check_branch
          %213 = sbr.rel (%p211) target = $region32
        $region31: #{tpu_custom_call.1} parent=27 // pred_region
          %s214 = smul.u32 32, %s20
          %s215 = smul.u32 2, %s22
          %p216 = scmp.lt.s32.totalorder %s214, 63
          %s217 = scalar_select %p216, %s214, 63
          %p218 = scmp.lt.s32.totalorder %s215, 1
          %s219 = scalar_select %p218, %s215, 1
          %s220 = smul.addr %s217, 2
          %s221 = sadd.s32 %s219, %s220
          %s222 = smul.addr %s221, 4
          %s223 = scalar_lea.vmem %s0, %s222
          %s224 = smul.u32 32, %s20
          %s225 = smul.u32 2, %s22
        $region32: #{tpu_custom_call.1} parent=27 // pred_fallthru
          _
      $region28: #{tpu_custom_call.1} parent=5 // pred_fallthru
        _
      %p226 = scmp.le.s32.totalorder 1, %s13
      %p227 = scmp.lt.s32.totalorder %s13, 3
      %p228 = pnand %p226, %p227
      %p229 = pneg %p228
      // Predicated region
      $region33: #{tpu_custom_call.1} parent=5 // pred_check
        _
      $region34: #{tpu_custom_call.1} parent=5 // pred_check_branch
        %231 = sbr.rel (%p228) target = $region36
      $region35: #{tpu_custom_call.1} parent=5 // pred_region
        %s232 = ssub.s32 %s13, 1
        %s233 = smul.u32 32, %s23
        %s234 = smul.u32 2, %s25
        %p235 = scmp.lt.s32.totalorder %s233, 63
        %s236 = scalar_select %p235, %s233, 63
        %p237 = scmp.lt.s32.totalorder %s234, 1
        %s238 = scalar_select %p237, %s234, 1
        %s239 = smul.addr %s236, 2
        %s240 = sadd.s32 %s238, %s239
        %s241 = smul.addr %s240, 4
        %s242 = scalar_lea.vmem %s0, %s241
        %p243 = pneg %p60
        %p244 = pneg %p57
        %s245 = smul.u32 19, %s25
        %p246 = scmp.lt.s32.totalorder %s245, 18
        %s247 = scalar_select %p246, %s245, 18
        %p248 = scmp.lt.s32.totalorder %s24, 0
        %s249 = scalar_select %p248, %s24, 0
        %s250 = sadd.s32 %s249, %s247
        %s251 = smul.addr %s250, 4
        %s252 = scalar_lea.vmem %s1, %s251
        %p253 = pneg %p88
        %p254 = pneg %p85
        %p255 = scmp.lt.s32.totalorder %s24, 0
        %s256 = scalar_select %p255, %s24, 0
        %s257 = scalar_lea.vmem %s2, %s256
        %p258 = pneg %p114
        %p259 = pneg %p111
        %p260 = scmp.lt.s32.totalorder %s24, 0
        %s261 = scalar_select %p260, %s24, 0
        %s262 = scalar_lea.vmem %s3, %s261
        %p263 = pneg %p140
        %p264 = pneg %p137
        %p265 = pneg %p168
        %p266 = pneg %p165
        %s267 = sand.u32 %s155, 1
        %s268 = scalar_lea.sflag [#allocation4], %s267
        %s269 = sand.u32 %s155, 1
        %s270 = smul.addr %s269, 128
        %s271 = scalar_lea.vmem [#allocation3], %s270
        %s272 = smul.u32 32, %s23
        %s273 = smul.u32 2, %s25
        %p274 = scmp.lt.s32.totalorder %s272, 63
        %s275 = scalar_select %p274, %s272, 63
        %p276 = scmp.lt.s32.totalorder %s273, 1
        %s277 = scalar_select %p276, %s273, 1
        %s278 = smul.addr %s275, 2
        %s279 = sadd.s32 %s277, %s278
        %s280 = smul.addr %s279, 4
        %s281 = scalar_lea.vmem %s0, %s280
        %s282 = smul.u32 32, %s23
        %s283 = smul.u32 2, %s25
        %s284 = smul.u32 19, %s25
        %p285 = scmp.lt.s32.totalorder %s284, 18
        %s286 = scalar_select %p285, %s284, 18
        %p287 = scmp.lt.s32.totalorder %s24, 0
        %s288 = scalar_select %p287, %s24, 0
        %s289 = sadd.s32 %s288, %s286
        %s290 = smul.addr %s289, 4
        %s291 = scalar_lea.vmem %s1, %s290
        %s292 = smul.u32 19, %s25
        %p293 = scmp.lt.s32.totalorder %s24, 0
        %s294 = scalar_select %p293, %s24, 0
        %s295 = scalar_lea.vmem %s2, %s294
        %p296 = scmp.lt.s32.totalorder %s24, 0
        %s297 = scalar_select %p296, %s24, 0
        %s298 = scalar_lea.vmem %s3, %s297
        %s299 = smul.u32 32, %s23
        %p301 = scmp.eq.s32.totalorder %s25, 0
        // Predicated region
        $region37: #{tpu_custom_call.1} parent=35 // pred_check
          %p302 = pneg %p301
        $region38: #{tpu_custom_call.1} parent=35 // pred_check_branch
          %304 = sbr.rel (%p302) target = $region40
        $region39: #{tpu_custom_call.1} parent=35 // pred_region
          %305 = vst [vmem:[#allocation2] sm:$0xff] 0.0
          %306 = vst [vmem:[#allocation2 + $0x8] sm:$0xff] 0.0
          %307 = vst [vmem:[#allocation2 + $0x10] sm:$0xff] 0.0
          %308 = vst [vmem:[#allocation2 + $0x18] sm:$0xff] 0.0
          %309 = vst [vmem:[#allocation2 + $0x20] sm:$0xff] 0.0
          %310 = vst [vmem:[#allocation2 + $0x28] sm:$0xff] 0.0
          %311 = vst [vmem:[#allocation2 + $0x30] sm:$0xff] 0.0
          %312 = vst [vmem:[#allocation2 + $0x38] sm:$0xff] 0.0
          %313 = vst [vmem:[#allocation2 + $0x40] sm:$0xff] 0.0
          %314 = vst [vmem:[#allocation2 + $0x48] sm:$0xff] 0.0
          %315 = vst [vmem:[#allocation2 + $0x50] sm:$0xff] 0.0
          %316 = vst [vmem:[#allocation2 + $0x58] sm:$0xff] 0.0
          %317 = vst [vmem:[#allocation2 + $0x60] sm:$0xff] 0.0
          %318 = vst [vmem:[#allocation2 + $0x68] sm:$0xff] 0.0
          %319 = vst [vmem:[#allocation2 + $0x70] sm:$0xff] 0.0
          %320 = vst [vmem:[#allocation2 + $0x78] sm:$0xff] 0.0
          %321 = vst [vmem:[#allocation2 + $0x80] sm:$0xff] 0.0
          %322 = vst [vmem:[#allocation2 + $0x88] sm:$0xff] 0.0
          %323 = vst [vmem:[#allocation2 + $0x90] sm:$0xff] 0.0
          %324 = vst [vmem:[#allocation2 + $0x98] sm:$0xff] 0.0
          %325 = vst [vmem:[#allocation2 + $0xa0] sm:$0xff] 0.0
          %326 = vst [vmem:[#allocation2 + $0xa8] sm:$0xff] 0.0
          %327 = vst [vmem:[#allocation2 + $0xb0] sm:$0xff] 0.0
          %328 = vst [vmem:[#allocation2 + $0xb8] sm:$0xff] 0.0
          %329 = vst [vmem:[#allocation2 + $0xc0] sm:$0xff] 0.0
          %330 = vst [vmem:[#allocation2 + $0xc8] sm:$0xff] 0.0
          %331 = vst [vmem:[#allocation2 + $0xd0] sm:$0xff] 0.0
          %332 = vst [vmem:[#allocation2 + $0xd8] sm:$0xff] 0.0
          %333 = vst [vmem:[#allocation2 + $0xe0] sm:$0xff] 0.0
          %334 = vst [vmem:[#allocation2 + $0xe8] sm:$0xff] 0.0
          %335 = vst [vmem:[#allocation2 + $0xf0] sm:$0xff] 0.0
          %336 = vst [vmem:[#allocation2 + $0xf8] sm:$0xff] 0.0
        $region40: #{tpu_custom_call.1} parent=35 // pred_fallthru
          _
        %v337 = vld [vmem:[#allocation2] sm:$0xff]
        %v338 = vld [vmem:[#allocation2 + $0x8] sm:$0xff]
        %v339 = vld [vmem:[#allocation2 + $0x10] sm:$0xff]
        %v340 = vld [vmem:[#allocation2 + $0x18] sm:$0xff]
        %v341 = vld [vmem:[#allocation2 + $0x20] sm:$0xff]
        %v342 = vld [vmem:[#allocation2 + $0x28] sm:$0xff]
        %v343 = vld [vmem:[#allocation2 + $0x30] sm:$0xff]
        %v344 = vld [vmem:[#allocation2 + $0x38] sm:$0xff]
        %v345 = vld [vmem:[#allocation2 + $0x40] sm:$0xff]
        %v346 = vld [vmem:[#allocation2 + $0x48] sm:$0xff]
        %v347 = vld [vmem:[#allocation2 + $0x50] sm:$0xff]
        %v348 = vld [vmem:[#allocation2 + $0x58] sm:$0xff]
        %v349 = vld [vmem:[#allocation2 + $0x60] sm:$0xff]
        %v350 = vld [vmem:[#allocation2 + $0x68] sm:$0xff]
        %v351 = vld [vmem:[#allocation2 + $0x70] sm:$0xff]
        %v352 = vld [vmem:[#allocation2 + $0x78] sm:$0xff]
        %v353 = vld [vmem:[#allocation2 + $0x80] sm:$0xff]
        %v354 = vld [vmem:[#allocation2 + $0x88] sm:$0xff]
        %v355 = vld [vmem:[#allocation2 + $0x90] sm:$0xff]
        %v356 = vld [vmem:[#allocation2 + $0x98] sm:$0xff]
        %v357 = vld [vmem:[#allocation2 + $0xa0] sm:$0xff]
        %v358 = vld [vmem:[#allocation2 + $0xa8] sm:$0xff]
        %v359 = vld [vmem:[#allocation2 + $0xb0] sm:$0xff]
        %v360 = vld [vmem:[#allocation2 + $0xb8] sm:$0xff]
        %v361 = vld [vmem:[#allocation2 + $0xc0] sm:$0xff]
        %v362 = vld [vmem:[#allocation2 + $0xc8] sm:$0xff]
        %v363 = vld [vmem:[#allocation2 + $0xd0] sm:$0xff]
        %v364 = vld [vmem:[#allocation2 + $0xd8] sm:$0xff]
        %v365 = vld [vmem:[#allocation2 + $0xe0] sm:$0xff]
        %v366 = vld [vmem:[#allocation2 + $0xe8] sm:$0xff]
        %v367 = vld [vmem:[#allocation2 + $0xf0] sm:$0xff]
        %v368 = vld [vmem:[#allocation2 + $0xf8] sm:$0xff]
        %v369 = vld [vmem:[%s281] sm:$0xff]
        %v370 = vld [vmem:[%s281 + $0x8] sm:$0xff]
        %v371 = vld [vmem:[%s281 + $0x10] sm:$0xff]
        %v372 = vld [vmem:[%s281 + $0x18] sm:$0xff]
        %v373 = vld [vmem:[%s281 + $0x20] sm:$0xff]
        %v374 = vld [vmem:[%s281 + $0x28] sm:$0xff]
        %v375 = vld [vmem:[%s281 + $0x30] sm:$0xff]
        %v376 = vld [vmem:[%s281 + $0x38] sm:$0xff]
        %v377 = vld [vmem:[%s281 + $0x40] sm:$0xff]
        %v378 = vld [vmem:[%s281 + $0x48] sm:$0xff]
        %v379 = vld [vmem:[%s281 + $0x50] sm:$0xff]
        %v380 = vld [vmem:[%s281 + $0x58] sm:$0xff]
        %v381 = vld [vmem:[%s281 + $0x60] sm:$0xff]
        %v382 = vld [vmem:[%s281 + $0x68] sm:$0xff]
        %v383 = vld [vmem:[%s281 + $0x70] sm:$0xff]
        %v384 = vld [vmem:[%s281 + $0x78] sm:$0xff]
        %v385 = vld [vmem:[%s281 + $0x80] sm:$0xff]
        %v386 = vld [vmem:[%s281 + $0x88] sm:$0xff]
        %v387 = vld [vmem:[%s281 + $0x90] sm:$0xff]
        %v388 = vld [vmem:[%s281 + $0x98] sm:$0xff]
        %v389 = vld [vmem:[%s281 + $0xa0] sm:$0xff]
        %v390 = vld [vmem:[%s281 + $0xa8] sm:$0xff]
        %v391 = vld [vmem:[%s281 + $0xb0] sm:$0xff]
        %v392 = vld [vmem:[%s281 + $0xb8] sm:$0xff]
        %v393 = vld [vmem:[%s281 + $0xc0] sm:$0xff]
        %v394 = vld [vmem:[%s281 + $0xc8] sm:$0xff]
        %v395 = vld [vmem:[%s281 + $0xd0] sm:$0xff]
        %v396 = vld [vmem:[%s281 + $0xd8] sm:$0xff]
        %v397 = vld [vmem:[%s281 + $0xe0] sm:$0xff]
        %v398 = vld [vmem:[%s281 + $0xe8] sm:$0xff]
        %v399 = vld [vmem:[%s281 + $0xf0] sm:$0xff]
        %v400 = vld [vmem:[%s281 + $0xf8] sm:$0xff]
        %v401 = vld [vmem:[%s291] sm:$0xf]
        %v402 = vld [vmem:[%s291 + $0x4] sm:$0xf]
        %v403 = vld [vmem:[%s291 + $0x8] sm:$0xf]
        %v404 = vld [vmem:[%s291 + $0xc] sm:$0xf]
        %v405 = vld [vmem:[%s291 + $0x10] sm:$0xf]
        %v406 = vld [vmem:[%s291 + $0x14] sm:$0xf]
        %v407 = vld [vmem:[%s291 + $0x18] sm:$0xf]
        %v408 = vld [vmem:[%s291 + $0x1c] sm:$0xf]
        %v409 = vld [vmem:[%s291 + $0x20] sm:$0xf]
        %v410 = vld [vmem:[%s291 + $0x24] sm:$0xf]
        %v411 = vld [vmem:[%s291 + $0x28] sm:$0xf]
        %v412 = vld [vmem:[%s291 + $0x2c] sm:$0xf]
        %v413 = vld [vmem:[%s291 + $0x30] sm:$0xf]
        %v414 = vld [vmem:[%s291 + $0x34] sm:$0xf]
        %v415 = vld [vmem:[%s291 + $0x38] sm:$0xf]
        %v416 = vld [vmem:[%s291 + $0x3c] sm:$0xf]
        %v417 = vld [vmem:[%s291 + $0x40] sm:$0xf]
        %v418 = vld [vmem:[%s291 + $0x44] sm:$0xf]
        %v419 = vld [vmem:[%s291 + $0x48] sm:$0x3]
        %v452 = vunpack.c.l.b16 %v369
        %v453 = vunpack.c.h.b16 %v369
        %v454 = vunpack.c.l.b16 %v370
        %v455 = vunpack.c.h.b16 %v370
        %v456 = vunpack.c.l.b16 %v371
        %v457 = vunpack.c.h.b16 %v371
        %v458 = vunpack.c.l.b16 %v372
        %v459 = vunpack.c.h.b16 %v372
        %v460 = vunpack.c.l.b16 %v373
        %v461 = vunpack.c.h.b16 %v373
        %v462 = vunpack.c.l.b16 %v374
        %v463 = vunpack.c.h.b16 %v374
        %v464 = vunpack.c.l.b16 %v375
        %v465 = vunpack.c.h.b16 %v375
        %v466 = vunpack.c.l.b16 %v376
        %v467 = vunpack.c.h.b16 %v376
        %v468 = vunpack.c.l.b16 %v377
        %v469 = vunpack.c.h.b16 %v377
        %v470 = vunpack.c.l.b16 %v378
        %v471 = vunpack.c.h.b16 %v378
        %v472 = vunpack.c.l.b16 %v379
        %v473 = vunpack.c.h.b16 %v379
        %v474 = vunpack.c.l.b16 %v380
        %v475 = vunpack.c.h.b16 %v380
        %v476 = vunpack.c.l.b16 %v381
        %v477 = vunpack.c.h.b16 %v381
        %v478 = vunpack.c.l.b16 %v382
        %v479 = vunpack.c.h.b16 %v382
        %v480 = vunpack.c.l.b16 %v383
        %v481 = vunpack.c.h.b16 %v383
        %v482 = vunpack.c.l.b16 %v384
        %v483 = vunpack.c.h.b16 %v384
        %v484 = vunpack.c.l.b16 %v385
        %v485 = vunpack.c.h.b16 %v385
        %v486 = vunpack.c.l.b16 %v386
        %v487 = vunpack.c.h.b16 %v386
        %v488 = vunpack.c.l.b16 %v387
        %v489 = vunpack.c.h.b16 %v387
        %v490 = vunpack.c.l.b16 %v388
        %v491 = vunpack.c.h.b16 %v388
        %v492 = vunpack.c.l.b16 %v389
        %v493 = vunpack.c.h.b16 %v389
        %v494 = vunpack.c.l.b16 %v390
        %v495 = vunpack.c.h.b16 %v390
        %v496 = vunpack.c.l.b16 %v391
        %v497 = vunpack.c.h.b16 %v391
        %v498 = vunpack.c.l.b16 %v392
        %v499 = vunpack.c.h.b16 %v392
        %v500 = vunpack.c.l.b16 %v393
        %v501 = vunpack.c.h.b16 %v393
        %v502 = vunpack.c.l.b16 %v394
        %v503 = vunpack.c.h.b16 %v394
        %v504 = vunpack.c.l.b16 %v395
        %v505 = vunpack.c.h.b16 %v395
        %v506 = vunpack.c.l.b16 %v396
        %v507 = vunpack.c.h.b16 %v396
        %v508 = vunpack.c.l.b16 %v397
        %v509 = vunpack.c.h.b16 %v397
        %v510 = vunpack.c.l.b16 %v398
        %v511 = vunpack.c.h.b16 %v398
        %v512 = vunpack.c.l.b16 %v399
        %v513 = vunpack.c.h.b16 %v399
        %v514 = vunpack.c.l.b16 %v400
        %v515 = vunpack.c.h.b16 %v400
        %v516 = vpack.c.b16 %v454, %v452
        %v517 = vpack.c.b16 %v455, %v453
        %v518 = vpack.c.b16 %v458, %v456
        %v519 = vpack.c.b16 %v459, %v457
        %v520 = vpack.c.b16 %v462, %v460
        %v521 = vpack.c.b16 %v463, %v461
        %v522 = vpack.c.b16 %v466, %v464
        %v523 = vpack.c.b16 %v467, %v465
        %v524 = vpack.c.b16 %v470, %v468
        %v525 = vpack.c.b16 %v471, %v469
        %v526 = vpack.c.b16 %v474, %v472
        %v527 = vpack.c.b16 %v475, %v473
        %v528 = vpack.c.b16 %v478, %v476
        %v529 = vpack.c.b16 %v479, %v477
        %v530 = vpack.c.b16 %v482, %v480
        %v531 = vpack.c.b16 %v483, %v481
        %v532 = vpack.c.b16 %v486, %v484
        %v533 = vpack.c.b16 %v487, %v485
        %v534 = vpack.c.b16 %v490, %v488
        %v535 = vpack.c.b16 %v491, %v489
        %v536 = vpack.c.b16 %v494, %v492
        %v537 = vpack.c.b16 %v495, %v493
        %v538 = vpack.c.b16 %v498, %v496
        %v539 = vpack.c.b16 %v499, %v497
        %v540 = vpack.c.b16 %v502, %v500
        %v541 = vpack.c.b16 %v503, %v501
        %v542 = vpack.c.b16 %v506, %v504
        %v543 = vpack.c.b16 %v507, %v505
        %v544 = vpack.c.b16 %v510, %v508
        %v545 = vpack.c.b16 %v511, %v509
        %v546 = vpack.c.b16 %v514, %v512
        %v547 = vpack.c.b16 %v515, %v513
        %v583 = vunpack.c.l.b16 %v401
        %v584 = vunpack.c.l.b16 %v402
        %v585 = vunpack.c.l.b16 %v403
        %v586 = vunpack.c.l.b16 %v404
        %v587 = vunpack.c.l.b16 %v405
        %v588 = vunpack.c.l.b16 %v406
        %v589 = vunpack.c.l.b16 %v407
        %v590 = vunpack.c.l.b16 %v408
        %v591 = vunpack.c.l.b16 %v409
        %v592 = vunpack.c.l.b16 %v410
        %v593 = vunpack.c.l.b16 %v411
        %v594 = vunpack.c.l.b16 %v412
        %v595 = vunpack.c.l.b16 %v413
        %v596 = vunpack.c.l.b16 %v414
        %v597 = vunpack.c.l.b16 %v415
        %v598 = vunpack.c.l.b16 %v416
        %v599 = vunpack.c.l.b16 %v417
        %v600 = vunpack.c.l.b16 %v418
        %v601 = vunpack.c.l.b16 %v419
        %v602 = vpack.c.b16 %v584, %v583
        %v603 = vpack.c.b16 %v586, %v585
        %v604 = vpack.c.b16 %v588, %v587
        %v605 = vpack.c.b16 %v590, %v589
        %v606 = vpack.c.b16 %v592, %v591
        %v607 = vpack.c.b16 %v594, %v593
        %v608 = vpack.c.b16 %v596, %v595
        %v609 = vpack.c.b16 %v598, %v597
        %v610 = vpack.c.b16 %v600, %v599
        %v611 = vpack.c.b16 %v601, %v601
        %vm621 = vcmask 154624
        %v623 = vsel %vm621, %v517, 0
        %v626 = vsel %vm621, %v519, 0
        %v629 = vsel %vm621, %v521, 0
        %v632 = vsel %vm621, %v523, 0
        %v635 = vsel %vm621, %v525, 0
        %v638 = vsel %vm621, %v527, 0
        %v641 = vsel %vm621, %v529, 0
        %v644 = vsel %vm621, %v531, 0
        %v647 = vsel %vm621, %v533, 0
        %v650 = vsel %vm621, %v535, 0
        %v653 = vsel %vm621, %v537, 0
        %v656 = vsel %vm621, %v539, 0
        %v659 = vsel %vm621, %v541, 0
        %v662 = vsel %vm621, %v543, 0
        %v665 = vsel %vm621, %v545, 0
        %v668 = vsel %vm621, %v547, 0
        %vm670 = vcmask 1040384
        %vm671 = vcmask 1041408
        %v672 = vsel %vm670, 4294967295, 65535
        %v673 = vsel %vm671, %v672, 0
        %v675 = vand.u32 %v611, %v673
        %677 = vmatprep.subr.bf16.mxu0 0
        %678 = vmatpush1.bf16.msra.mxu0 %v602
        %679 = vmatprep.subr.bf16.mxu0 0
        %680 = vmatpush1.bf16.msra.mxu0 %v603
        %681 = vmatprep.subr.bf16.mxu0 0
        %682 = vmatpush1.bf16.msra.mxu0 %v604
        %683 = vmatprep.subr.bf16.mxu0 0
        %684 = vmatpush1.bf16.msra.mxu0 %v605
        %685 = vmatprep.subr.bf16.mxu0 0
        %686 = vmatpush1.bf16.msra.mxu0 %v606
        %687 = vmatprep.subr.bf16.mxu0 0
        %688 = vmatpush1.bf16.msra.mxu0 %v607
        %689 = vmatprep.subr.bf16.mxu0 0
        %690 = vmatpush1.bf16.msra.mxu0 %v608
        %691 = vmatprep.subr.bf16.mxu0 0
        %692 = vmatpush1.bf16.msra.mxu0 %v609
        %693 = vmatprep.subr.bf16.mxu0 0
        %694 = vmatpush1.bf16.msra.mxu0 %v610
        %695 = vmatprep.subr.bf16.mxu0 0
        %696 = vmatpush1.bf16.msra.mxu0 %v675
        %697 = vmatprep.subr.bf16.mxu0 0
        %698 = vmatpush1.bf16.msra.mxu0 0
        %699 = vmatprep.subr.bf16.mxu0 0
        %700 = vmatpush1.bf16.msra.mxu0 0
        %701 = vmatprep.subr.bf16.mxu0 0
        %702 = vmatpush1.bf16.msra.mxu0 0
        %703 = vmatprep.subr.bf16.mxu0 0
        %704 = vmatpush1.bf16.msra.mxu0 0
        %705 = vmatprep.subr.bf16.mxu0 0
        %706 = vmatpush1.bf16.msra.mxu0 0
        %707 = vmatprep.subr.bf16.mxu0 0
        %708 = vmatpush1.bf16.msra.mxu0 0
        %709 = vmatprep.mubr.bf16.mxu0 %v623
        %710 = vmatmul.mubr.bf16.gmra.mrb[0].mxu0 %v516
        %v711 = vpop.f32.mrb[0].mxu0
        %v712 = vadd.f32 0.0, %v711
        %v713 = vpop.f32.mrb[0].mxu0
        %v714 = vpop.f32.mrb[0].mxu0
        %v715 = vadd.f32 0.0, %v714
        %v716 = vpop.f32.mrb[0].mxu0
        %717 = vmatprep.mubr.bf16.mxu0 %v626
        %718 = vmatmul.mubr.bf16.gmra.mrb[0].mxu0 %v518
        %v719 = vpop.f32.mrb[0].mxu0
        %v720 = vadd.f32 0.0, %v719
        %v721 = vpop.f32.mrb[0].mxu0
        %v722 = vpop.f32.mrb[0].mxu0
        %v723 = vadd.f32 0.0, %v722
        %v724 = vpop.f32.mrb[0].mxu0
        %725 = vmatprep.mubr.bf16.mxu0 %v629
        %726 = vmatmul.mubr.bf16.gmra.mrb[0].mxu0 %v520
        %v727 = vpop.f32.mrb[0].mxu0
        %v728 = vadd.f32 0.0, %v727
        %v729 = vpop.f32.mrb[0].mxu0
        %v730 = vpop.f32.mrb[0].mxu0
        %v731 = vadd.f32 0.0, %v730
        %v732 = vpop.f32.mrb[0].mxu0
        %733 = vmatprep.mubr.bf16.mxu0 %v632
        %734 = vmatmul.mubr.bf16.gmra.mrb[0].mxu0 %v522
        %v735 = vpop.f32.mrb[0].mxu0
        %v736 = vadd.f32 0.0, %v735
        %v737 = vpop.f32.mrb[0].mxu0
        %v738 = vpop.f32.mrb[0].mxu0
        %v739 = vadd.f32 0.0, %v738
        %v740 = vpop.f32.mrb[0].mxu0
        %741 = vmatprep.mubr.bf16.mxu0 %v635
        %742 = vmatmul.mubr.bf16.gmra.mrb[0].mxu0 %v524
        %v743 = vpop.f32.mrb[0].mxu0
        %v744 = vadd.f32 0.0, %v743
        %v745 = vpop.f32.mrb[0].mxu0
        %v746 = vpop.f32.mrb[0].mxu0
        %v747 = vadd.f32 0.0, %v746
        %v748 = vpop.f32.mrb[0].mxu0
        %749 = vmatprep.mubr.bf16.mxu0 %v638
        %750 = vmatmul.mubr.bf16.gmra.mrb[0].mxu0 %v526
        %v751 = vpop.f32.mrb[0].mxu0
        %v752 = vadd.f32 0.0, %v751
        %v753 = vpop.f32.mrb[0].mxu0
        %v754 = vpop.f32.mrb[0].mxu0
        %v755 = vadd.f32 0.0, %v754
        %v756 = vpop.f32.mrb[0].mxu0
        %757 = vmatprep.mubr.bf16.mxu0 %v641
        %758 = vmatmul.mubr.bf16.gmra.mrb[0].mxu0 %v528
        %v759 = vpop.f32.mrb[0].mxu0
        %v760 = vadd.f32 0.0, %v759
        %v761 = vpop.f32.mrb[0].mxu0
        %v762 = vpop.f32.mrb[0].mxu0
        %v763 = vadd.f32 0.0, %v762
        %v764 = vpop.f32.mrb[0].mxu0
        %765 = vmatprep.mubr.bf16.mxu0 %v644
        %766 = vmatmul.mubr.bf16.gmra.mrb[0].mxu0 %v530
        %v767 = vpop.f32.mrb[0].mxu0
        %v768 = vadd.f32 0.0, %v767
        %v769 = vpop.f32.mrb[0].mxu0
        %v770 = vpop.f32.mrb[0].mxu0
        %v771 = vadd.f32 0.0, %v770
        %v772 = vpop.f32.mrb[0].mxu0
        %773 = vmatprep.mubr.bf16.mxu0 %v647
        %774 = vmatmul.mubr.bf16.gmra.mrb[0].mxu0 %v532
        %v775 = vpop.f32.mrb[0].mxu0
        %v776 = vadd.f32 0.0, %v775
        %v777 = vpop.f32.mrb[0].mxu0
        %v778 = vpop.f32.mrb[0].mxu0
        %v779 = vadd.f32 0.0, %v778
        %v780 = vpop.f32.mrb[0].mxu0
        %781 = vmatprep.mubr.bf16.mxu0 %v650
        %782 = vmatmul.mubr.bf16.gmra.mrb[0].mxu0 %v534
        %v783 = vpop.f32.mrb[0].mxu0
        %v784 = vadd.f32 0.0, %v783
        %v785 = vpop.f32.mrb[0].mxu0
        %v786 = vpop.f32.mrb[0].mxu0
        %v787 = vadd.f32 0.0, %v786
        %v788 = vpop.f32.mrb[0].mxu0
        %789 = vmatprep.mubr.bf16.mxu0 %v653
        %790 = vmatmul.mubr.bf16.gmra.mrb[0].mxu0 %v536
        %v791 = vpop.f32.mrb[0].mxu0
        %v792 = vadd.f32 0.0, %v791
        %v793 = vpop.f32.mrb[0].mxu0
        %v794 = vpop.f32.mrb[0].mxu0
        %v795 = vadd.f32 0.0, %v794
        %v796 = vpop.f32.mrb[0].mxu0
        %797 = vmatprep.mubr.bf16.mxu0 %v656
        %798 = vmatmul.mubr.bf16.gmra.mrb[0].mxu0 %v538
        %v799 = vpop.f32.mrb[0].mxu0
        %v800 = vadd.f32 0.0, %v799
        %v801 = vpop.f32.mrb[0].mxu0
        %v802 = vpop.f32.mrb[0].mxu0
        %v803 = vadd.f32 0.0, %v802
        %v804 = vpop.f32.mrb[0].mxu0
        %805 = vmatprep.mubr.bf16.mxu0 %v659
        %806 = vmatmul.mubr.bf16.gmra.mrb[0].mxu0 %v540
        %v807 = vpop.f32.mrb[0].mxu0
        %v808 = vadd.f32 0.0, %v807
        %v809 = vpop.f32.mrb[0].mxu0
        %v810 = vpop.f32.mrb[0].mxu0
        %v811 = vadd.f32 0.0, %v810
        %v812 = vpop.f32.mrb[0].mxu0
        %813 = vmatprep.mubr.bf16.mxu0 %v662
        %814 = vmatmul.mubr.bf16.gmra.mrb[0].mxu0 %v542
        %v815 = vpop.f32.mrb[0].mxu0
        %v816 = vadd.f32 0.0, %v815
        %v817 = vpop.f32.mrb[0].mxu0
        %v818 = vpop.f32.mrb[0].mxu0
        %v819 = vadd.f32 0.0, %v818
        %v820 = vpop.f32.mrb[0].mxu0
        %821 = vmatprep.mubr.bf16.mxu0 %v665
        %822 = vmatmul.mubr.bf16.gmra.mrb[0].mxu0 %v544
        %v823 = vpop.f32.mrb[0].mxu0
        %v824 = vadd.f32 0.0, %v823
        %v825 = vpop.f32.mrb[0].mxu0
        %v826 = vpop.f32.mrb[0].mxu0
        %v827 = vadd.f32 0.0, %v826
        %v828 = vpop.f32.mrb[0].mxu0
        %829 = vmatprep.mubr.bf16.mxu0 %v668
        %830 = vmatmul.mubr.bf16.gmra.mrb[0].mxu0 %v546
        %v831 = vpop.f32.mrb[0].mxu0
        %v832 = vadd.f32 0.0, %v831
        %v833 = vpop.f32.mrb[0].mxu0
        %v834 = vpop.f32.mrb[0].mxu0
        %v835 = vadd.f32 0.0, %v834
        %v836 = vpop.f32.mrb[0].mxu0
        %837 = vdwg.mxu0
        %v838 = vadd.f32 %v337, %v712
        %v839 = vadd.f32 %v338, %v715
        %v840 = vadd.f32 %v339, %v720
        %v841 = vadd.f32 %v340, %v723
        %v842 = vadd.f32 %v341, %v728
        %v843 = vadd.f32 %v342, %v731
        %v844 = vadd.f32 %v343, %v736
        %v845 = vadd.f32 %v344, %v739
        %v846 = vadd.f32 %v345, %v744
        %v847 = vadd.f32 %v346, %v747
        %v848 = vadd.f32 %v347, %v752
        %v849 = vadd.f32 %v348, %v755
        %v850 = vadd.f32 %v349, %v760
        %v851 = vadd.f32 %v350, %v763
        %v852 = vadd.f32 %v351, %v768
        %v853 = vadd.f32 %v352, %v771
        %v854 = vadd.f32 %v353, %v776
        %v855 = vadd.f32 %v354, %v779
        %v856 = vadd.f32 %v355, %v784
        %v857 = vadd.f32 %v356, %v787
        %v858 = vadd.f32 %v357, %v792
        %v859 = vadd.f32 %v358, %v795
        %v860 = vadd.f32 %v359, %v800
        %v861 = vadd.f32 %v360, %v803
        %v862 = vadd.f32 %v361, %v808
        %v863 = vadd.f32 %v362, %v811
        %v864 = vadd.f32 %v363, %v816
        %v865 = vadd.f32 %v364, %v819
        %v866 = vadd.f32 %v365, %v824
        %v867 = vadd.f32 %v366, %v827
        %v868 = vadd.f32 %v367, %v832
        %v869 = vadd.f32 %v368, %v835
        %870 = vst [vmem:[#allocation2] sm:$0xff] %v838
        %871 = vst [vmem:[#allocation2 + $0x8] sm:$0xff] %v839
        %872 = vst [vmem:[#allocation2 + $0x10] sm:$0xff] %v840
        %873 = vst [vmem:[#allocation2 + $0x18] sm:$0xff] %v841
        %874 = vst [vmem:[#allocation2 + $0x20] sm:$0xff] %v842
        %875 = vst [vmem:[#allocation2 + $0x28] sm:$0xff] %v843
        %876 = vst [vmem:[#allocation2 + $0x30] sm:$0xff] %v844
        %877 = vst [vmem:[#allocation2 + $0x38] sm:$0xff] %v845
        %878 = vst [vmem:[#allocation2 + $0x40] sm:$0xff] %v846
        %879 = vst [vmem:[#allocation2 + $0x48] sm:$0xff] %v847
        %880 = vst [vmem:[#allocation2 + $0x50] sm:$0xff] %v848
        %881 = vst [vmem:[#allocation2 + $0x58] sm:$0xff] %v849
        %882 = vst [vmem:[#allocation2 + $0x60] sm:$0xff] %v850
        %883 = vst [vmem:[#allocation2 + $0x68] sm:$0xff] %v851
        %884 = vst [vmem:[#allocation2 + $0x70] sm:$0xff] %v852
        %885 = vst [vmem:[#allocation2 + $0x78] sm:$0xff] %v853
        %886 = vst [vmem:[#allocation2 + $0x80] sm:$0xff] %v854
        %887 = vst [vmem:[#allocation2 + $0x88] sm:$0xff] %v855
        %888 = vst [vmem:[#allocation2 + $0x90] sm:$0xff] %v856
        %889 = vst [vmem:[#allocation2 + $0x98] sm:$0xff] %v857
        %890 = vst [vmem:[#allocation2 + $0xa0] sm:$0xff] %v858
        %891 = vst [vmem:[#allocation2 + $0xa8] sm:$0xff] %v859
        %892 = vst [vmem:[#allocation2 + $0xb0] sm:$0xff] %v860
        %893 = vst [vmem:[#allocation2 + $0xb8] sm:$0xff] %v861
        %894 = vst [vmem:[#allocation2 + $0xc0] sm:$0xff] %v862
        %895 = vst [vmem:[#allocation2 + $0xc8] sm:$0xff] %v863
        %896 = vst [vmem:[#allocation2 + $0xd0] sm:$0xff] %v864
        %897 = vst [vmem:[#allocation2 + $0xd8] sm:$0xff] %v865
        %898 = vst [vmem:[#allocation2 + $0xe0] sm:$0xff] %v866
        %899 = vst [vmem:[#allocation2 + $0xe8] sm:$0xff] %v867
        %900 = vst [vmem:[#allocation2 + $0xf0] sm:$0xff] %v868
        %901 = vst [vmem:[#allocation2 + $0xf8] sm:$0xff] %v869
        // Predicated region
        $region41: #{tpu_custom_call.1} parent=35 // pred_check
          %p902 = pneg %p301
        $region42: #{tpu_custom_call.1} parent=35 // pred_check_branch
          %904 = sbr.rel (%p902) target = $region44
        $region43: #{tpu_custom_call.1} parent=35 // pred_region
          %v905 = vld [vmem:[#allocation2] sm:$0xff]
          %v906 = vld [vmem:[#allocation2 + $0x8] sm:$0xff]
          %v907 = vld [vmem:[#allocation2 + $0x10] sm:$0xff]
          %v908 = vld [vmem:[#allocation2 + $0x18] sm:$0xff]
          %v909 = vld [vmem:[#allocation2 + $0x20] sm:$0xff]
          %v910 = vld [vmem:[#allocation2 + $0x28] sm:$0xff]
          %v911 = vld [vmem:[#allocation2 + $0x30] sm:$0xff]
          %v912 = vld [vmem:[#allocation2 + $0x38] sm:$0xff]
          %v913 = vld [vmem:[#allocation2 + $0x40] sm:$0xff]
          %v914 = vld [vmem:[#allocation2 + $0x48] sm:$0xff]
          %v915 = vld [vmem:[#allocation2 + $0x50] sm:$0xff]
          %v916 = vld [vmem:[#allocation2 + $0x58] sm:$0xff]
          %v917 = vld [vmem:[#allocation2 + $0x60] sm:$0xff]
          %v918 = vld [vmem:[#allocation2 + $0x68] sm:$0xff]
          %v919 = vld [vmem:[#allocation2 + $0x70] sm:$0xff]
          %v920 = vld [vmem:[#allocation2 + $0x78] sm:$0xff]
          %v921 = vld [vmem:[#allocation2 + $0x80] sm:$0xff]
          %v922 = vld [vmem:[#allocation2 + $0x88] sm:$0xff]
          %v923 = vld [vmem:[#allocation2 + $0x90] sm:$0xff]
          %v924 = vld [vmem:[#allocation2 + $0x98] sm:$0xff]
          %v925 = vld [vmem:[#allocation2 + $0xa0] sm:$0xff]
          %v926 = vld [vmem:[#allocation2 + $0xa8] sm:$0xff]
          %v927 = vld [vmem:[#allocation2 + $0xb0] sm:$0xff]
          %v928 = vld [vmem:[#allocation2 + $0xb8] sm:$0xff]
          %v929 = vld [vmem:[#allocation2 + $0xc0] sm:$0xff]
          %v930 = vld [vmem:[#allocation2 + $0xc8] sm:$0xff]
          %v931 = vld [vmem:[#allocation2 + $0xd0] sm:$0xff]
          %v932 = vld [vmem:[#allocation2 + $0xd8] sm:$0xff]
          %v933 = vld [vmem:[#allocation2 + $0xe0] sm:$0xff]
          %v934 = vld [vmem:[#allocation2 + $0xe8] sm:$0xff]
          %v935 = vld [vmem:[#allocation2 + $0xf0] sm:$0xff]
          %v936 = vld [vmem:[#allocation2 + $0xf8] sm:$0xff]
          %v937 = vld [vmem:[%s295] sm:$0x1]
          %v939 = vlaneseq
          %v940 = vshrl.u32 %v939, 7
          %v941 = vsub.s32 0, %v940
          %v942 = vrot.slane %v937, %v941
          %v944 = vmul.f32 %v905, %v942
          %v945 = vmul.f32 %v906, %v942
          %v946 = vmul.f32 %v907, %v942
          %v947 = vmul.f32 %v908, %v942
          %v948 = vmul.f32 %v909, %v942
          %v949 = vmul.f32 %v910, %v942
          %v950 = vmul.f32 %v911, %v942
          %v951 = vmul.f32 %v912, %v942
          %v952 = vmul.f32 %v913, %v942
          %v953 = vmul.f32 %v914, %v942
          %v954 = vmul.f32 %v915, %v942
          %v955 = vmul.f32 %v916, %v942
          %v956 = vmul.f32 %v917, %v942
          %v957 = vmul.f32 %v918, %v942
          %v958 = vmul.f32 %v919, %v942
          %v959 = vmul.f32 %v920, %v942
          %v960 = vmul.f32 %v921, %v942
          %v961 = vmul.f32 %v922, %v942
          %v962 = vmul.f32 %v923, %v942
          %v963 = vmul.f32 %v924, %v942
          %v964 = vmul.f32 %v925, %v942
          %v965 = vmul.f32 %v926, %v942
          %v966 = vmul.f32 %v927, %v942
          %v967 = vmul.f32 %v928, %v942
          %v968 = vmul.f32 %v929, %v942
          %v969 = vmul.f32 %v930, %v942
          %v970 = vmul.f32 %v931, %v942
          %v971 = vmul.f32 %v932, %v942
          %v972 = vmul.f32 %v933, %v942
          %v973 = vmul.f32 %v934, %v942
          %v974 = vmul.f32 %v935, %v942
          %v975 = vmul.f32 %v936, %v942
          %v976 = vld [vmem:[%s298] sm:$0x1]
          %v978 = vlaneseq
          %v979 = vshrl.u32 %v978, 7
          %v980 = vsub.s32 0, %v979
          %v981 = vrot.slane %v976, %v980
          %v983 = vadd.f32 %v944, %v981
          %v984 = vadd.f32 %v945, %v981
          %v985 = vadd.f32 %v946, %v981
          %v986 = vadd.f32 %v947, %v981
          %v987 = vadd.f32 %v948, %v981
          %v988 = vadd.f32 %v949, %v981
          %v989 = vadd.f32 %v950, %v981
          %v990 = vadd.f32 %v951, %v981
          %v991 = vadd.f32 %v952, %v981
          %v992 = vadd.f32 %v953, %v981
          %v993 = vadd.f32 %v954, %v981
          %v994 = vadd.f32 %v955, %v981
          %v995 = vadd.f32 %v956, %v981
          %v996 = vadd.f32 %v957, %v981
          %v997 = vadd.f32 %v958, %v981
          %v998 = vadd.f32 %v959, %v981
          %v999 = vadd.f32 %v960, %v981
          %v1000 = vadd.f32 %v961, %v981
          %v1001 = vadd.f32 %v962, %v981
          %v1002 = vadd.f32 %v963, %v981
          %v1003 = vadd.f32 %v964, %v981
          %v1004 = vadd.f32 %v965, %v981
          %v1005 = vadd.f32 %v966, %v981
          %v1006 = vadd.f32 %v967, %v981
          %v1007 = vadd.f32 %v968, %v981
          %v1008 = vadd.f32 %v969, %v981
          %v1009 = vadd.f32 %v970, %v981
          %v1010 = vadd.f32 %v971, %v981
          %v1011 = vadd.f32 %v972, %v981
          %v1012 = vadd.f32 %v973, %v981
          %v1013 = vadd.f32 %v974, %v981
          %v1014 = vadd.f32 %v975, %v981
          %v1015 = vmax.f32 %v983, 0.0
          %v1016 = vmax.f32 %v984, 0.0
          %v1017 = vmax.f32 %v985, 0.0
          %v1018 = vmax.f32 %v986, 0.0
          %v1019 = vmax.f32 %v987, 0.0
          %v1020 = vmax.f32 %v988, 0.0
          %v1021 = vmax.f32 %v989, 0.0
          %v1022 = vmax.f32 %v990, 0.0
          %v1023 = vmax.f32 %v991, 0.0
          %v1024 = vmax.f32 %v992, 0.0
          %v1025 = vmax.f32 %v993, 0.0
          %v1026 = vmax.f32 %v994, 0.0
          %v1027 = vmax.f32 %v995, 0.0
          %v1028 = vmax.f32 %v996, 0.0
          %v1029 = vmax.f32 %v997, 0.0
          %v1030 = vmax.f32 %v998, 0.0
          %v1031 = vmax.f32 %v999, 0.0
          %v1032 = vmax.f32 %v1000, 0.0
          %v1033 = vmax.f32 %v1001, 0.0
          %v1034 = vmax.f32 %v1002, 0.0
          %v1035 = vmax.f32 %v1003, 0.0
          %v1036 = vmax.f32 %v1004, 0.0
          %v1037 = vmax.f32 %v1005, 0.0
          %v1038 = vmax.f32 %v1006, 0.0
          %v1039 = vmax.f32 %v1007, 0.0
          %v1040 = vmax.f32 %v1008, 0.0
          %v1041 = vmax.f32 %v1009, 0.0
          %v1042 = vmax.f32 %v1010, 0.0
          %v1043 = vmax.f32 %v1011, 0.0
          %v1044 = vmax.f32 %v1012, 0.0
          %v1045 = vmax.f32 %v1013, 0.0
          %v1046 = vmax.f32 %v1014, 0.0
          %v1047 = vpack.c.bf16 %v1016, %v1015
          %v1048 = vpack.c.bf16 %v1018, %v1017
          %v1049 = vpack.c.bf16 %v1020, %v1019
          %v1050 = vpack.c.bf16 %v1022, %v1021
          %v1051 = vpack.c.bf16 %v1024, %v1023
          %v1052 = vpack.c.bf16 %v1026, %v1025
          %v1053 = vpack.c.bf16 %v1028, %v1027
          %v1054 = vpack.c.bf16 %v1030, %v1029
          %v1055 = vpack.c.bf16 %v1032, %v1031
          %v1056 = vpack.c.bf16 %v1034, %v1033
          %v1057 = vpack.c.bf16 %v1036, %v1035
          %v1058 = vpack.c.bf16 %v1038, %v1037
          %v1059 = vpack.c.bf16 %v1040, %v1039
          %v1060 = vpack.c.bf16 %v1042, %v1041
          %v1061 = vpack.c.bf16 %v1044, %v1043
          %v1062 = vpack.c.bf16 %v1046, %v1045
          %v1079 = vunpack.c.l.b16 %v1047
          %v1080 = vunpack.c.h.b16 %v1047
          %v1081 = vunpack.c.l.b16 %v1048
          %v1082 = vunpack.c.h.b16 %v1048
          %v1083 = vunpack.c.l.b16 %v1049
          %v1084 = vunpack.c.h.b16 %v1049
          %v1085 = vunpack.c.l.b16 %v1050
          %v1086 = vunpack.c.h.b16 %v1050
          %v1087 = vunpack.c.l.b16 %v1051
          %v1088 = vunpack.c.h.b16 %v1051
          %v1089 = vunpack.c.l.b16 %v1052
          %v1090 = vunpack.c.h.b16 %v1052
          %v1091 = vunpack.c.l.b16 %v1053
          %v1092 = vunpack.c.h.b16 %v1053
          %v1093 = vunpack.c.l.b16 %v1054
          %v1094 = vunpack.c.h.b16 %v1054
          %v1095 = vunpack.c.l.b16 %v1055
          %v1096 = vunpack.c.h.b16 %v1055
          %v1097 = vunpack.c.l.b16 %v1056
          %v1098 = vunpack.c.h.b16 %v1056
          %v1099 = vunpack.c.l.b16 %v1057
          %v1100 = vunpack.c.h.b16 %v1057
          %v1101 = vunpack.c.l.b16 %v1058
          %v1102 = vunpack.c.h.b16 %v1058
          %v1103 = vunpack.c.l.b16 %v1059
          %v1104 = vunpack.c.h.b16 %v1059
          %v1105 = vunpack.c.l.b16 %v1060
          %v1106 = vunpack.c.h.b16 %v1060
          %v1107 = vunpack.c.l.b16 %v1061
          %v1108 = vunpack.c.h.b16 %v1061
          %v1109 = vunpack.c.l.b16 %v1062
          %v1110 = vunpack.c.h.b16 %v1062
          %v1111 = vpack.c.b16 %v1079, %v1079
          %v1112 = vpack.c.b16 %v1080, %v1080
          %v1113 = vpack.c.b16 %v1081, %v1081
          %v1114 = vpack.c.b16 %v1082, %v1082
          %v1115 = vpack.c.b16 %v1083, %v1083
          %v1116 = vpack.c.b16 %v1084, %v1084
          %v1117 = vpack.c.b16 %v1085, %v1085
          %v1118 = vpack.c.b16 %v1086, %v1086
          %v1119 = vpack.c.b16 %v1087, %v1087
          %v1120 = vpack.c.b16 %v1088, %v1088
          %v1121 = vpack.c.b16 %v1089, %v1089
          %v1122 = vpack.c.b16 %v1090, %v1090
          %v1123 = vpack.c.b16 %v1091, %v1091
          %v1124 = vpack.c.b16 %v1092, %v1092
          %v1125 = vpack.c.b16 %v1093, %v1093
          %v1126 = vpack.c.b16 %v1094, %v1094
          %v1127 = vpack.c.b16 %v1095, %v1095
          %v1128 = vpack.c.b16 %v1096, %v1096
          %v1129 = vpack.c.b16 %v1097, %v1097
          %v1130 = vpack.c.b16 %v1098, %v1098
          %v1131 = vpack.c.b16 %v1099, %v1099
          %v1132 = vpack.c.b16 %v1100, %v1100
          %v1133 = vpack.c.b16 %v1101, %v1101
          %v1134 = vpack.c.b16 %v1102, %v1102
          %v1135 = vpack.c.b16 %v1103, %v1103
          %v1136 = vpack.c.b16 %v1104, %v1104
          %v1137 = vpack.c.b16 %v1105, %v1105
          %v1138 = vpack.c.b16 %v1106, %v1106
          %v1139 = vpack.c.b16 %v1107, %v1107
          %v1140 = vpack.c.b16 %v1108, %v1108
          %v1141 = vpack.c.b16 %v1109, %v1109
          %v1142 = vpack.c.b16 %v1110, %v1110
          %1175 = vst [vmem:[%s271] sm:$0xf] %v1111
          %1176 = vst [vmem:[%s271 + $0x4] sm:$0xf] %v1112
          %1177 = vst [vmem:[%s271 + $0x8] sm:$0xf] %v1113
          %1178 = vst [vmem:[%s271 + $0xc] sm:$0xf] %v1114
          %1179 = vst [vmem:[%s271 + $0x10] sm:$0xf] %v1115
          %1180 = vst [vmem:[%s271 + $0x14] sm:$0xf] %v1116
          %1181 = vst [vmem:[%s271 + $0x18] sm:$0xf] %v1117
          %1182 = vst [vmem:[%s271 + $0x1c] sm:$0xf] %v1118
          %1183 = vst [vmem:[%s271 + $0x20] sm:$0xf] %v1119
          %1184 = vst [vmem:[%s271 + $0x24] sm:$0xf] %v1120
          %1185 = vst [vmem:[%s271 + $0x28] sm:$0xf] %v1121
          %1186 = vst [vmem:[%s271 + $0x2c] sm:$0xf] %v1122
          %1187 = vst [vmem:[%s271 + $0x30] sm:$0xf] %v1123
          %1188 = vst [vmem:[%s271 + $0x34] sm:$0xf] %v1124
          %1189 = vst [vmem:[%s271 + $0x38] sm:$0xf] %v1125
          %1190 = vst [vmem:[%s271 + $0x3c] sm:$0xf] %v1126
          %1191 = vst [vmem:[%s271 + $0x40] sm:$0xf] %v1127
          %1192 = vst [vmem:[%s271 + $0x44] sm:$0xf] %v1128
          %1193 = vst [vmem:[%s271 + $0x48] sm:$0xf] %v1129
          %1194 = vst [vmem:[%s271 + $0x4c] sm:$0xf] %v1130
          %1195 = vst [vmem:[%s271 + $0x50] sm:$0xf] %v1131
          %1196 = vst [vmem:[%s271 + $0x54] sm:$0xf] %v1132
          %1197 = vst [vmem:[%s271 + $0x58] sm:$0xf] %v1133
          %1198 = vst [vmem:[%s271 + $0x5c] sm:$0xf] %v1134
          %1199 = vst [vmem:[%s271 + $0x60] sm:$0xf] %v1135
          %1200 = vst [vmem:[%s271 + $0x64] sm:$0xf] %v1136
          %1201 = vst [vmem:[%s271 + $0x68] sm:$0xf] %v1137
          %1202 = vst [vmem:[%s271 + $0x6c] sm:$0xf] %v1138
          %1203 = vst [vmem:[%s271 + $0x70] sm:$0xf] %v1139
          %1204 = vst [vmem:[%s271 + $0x74] sm:$0xf] %v1140
          %1205 = vst [vmem:[%s271 + $0x78] sm:$0xf] %v1141
          %1206 = vst [vmem:[%s271 + $0x7c] sm:$0xf] %v1142
        $region44: #{tpu_custom_call.1} parent=35 // pred_fallthru
          _
        %s1207 = sand.u32 %s155, 1
        %s1208 = scalar_lea.sflag [#allocation4], %s1207
        %s1209 = sand.u32 %s155, 1
        %s1210 = smul.addr %s1209, 128
        %s1211 = scalar_lea.vmem [#allocation3], %s1210
        // Predicated region
        $region45: #{tpu_custom_call.1} parent=35 // pred_check
          %p1212 = pneg %p165
        $region46: #{tpu_custom_call.1} parent=35 // pred_check_branch
          %1214 = sbr.rel (%p1212) target = $region48
        $region47: #{tpu_custom_call.1} parent=35 // pred_region
          %s1215 = smul.u32 32, %s23
          %s1217 = ssub.s32 2048, 2048
          %1218 = vsyncadd %s1208, %s1217
          %s1219 = sadd.s32 %s24, %s1215
          %s1220 = smul.addr %s1219, 64
          %s1221 = scalar_lea.hbm %s4, %s1220
          %s1222 = sshll.u32 %s1211, 4
          %s1223 = int_to_ptr.vmem [resolvable:$true] %s1222
          %1228 = dma.vmem_to_hbm [thread:$0]  %s1223, 2048, %s1221, %s1208, 64, 64, 4
        $region48: #{tpu_custom_call.1} parent=35 // pred_fallthru
          _
      $region36: #{tpu_custom_call.1} parent=5 // pred_fallthru
        _
      %p1229 = scmp.le.s32.totalorder 2, %s13
      // Predicated region
      $region49: #{tpu_custom_call.1} parent=5 // pred_check
        %p1230 = pneg %p1229
      $region50: #{tpu_custom_call.1} parent=5 // pred_check_branch
        %1232 = sbr.rel (%p1230) target = $region52
      $region51: #{tpu_custom_call.1} parent=5 // pred_region
        %s1233 = ssub.s32 %s13, 2
        // Predicated region
        $region53: #{tpu_custom_call.1} parent=51 // pred_check
          %p1234 = pneg %p171
        $region54: #{tpu_custom_call.1} parent=51 // pred_check_branch
          %1236 = sbr.rel (%p1234) target = $region56
        $region55: #{tpu_custom_call.1} parent=51 // pred_region
          %s1237 = sand.u32 %s156, 1
          %s1238 = scalar_lea.sflag [#allocation4], %s1237
          %s1239 = sand.u32 %s156, 1
          %s1240 = smul.addr %s1239, 128
          %s1241 = scalar_lea.vmem [#allocation3], %s1240
          %1242 = dma.done %s1238, 2048
        $region56: #{tpu_custom_call.1} parent=51 // pred_fallthru
          _
      $region52: #{tpu_custom_call.1} parent=5 // pred_fallthru
        _
    $region6: #{tpu_custom_call.1} parent=1 // loop_footer
      %s17 = sadd.s32 1, %s13
    $region7: #{tpu_custom_call.1} parent=1 // loop_footer_branch
      %12 = sbr.rel target = $region3
    $region8: #{tpu_custom_call.1} parent=1 // loop_exit
      _
    %1243 = vsyncpa [#allocation4], 1
    %s1244 = scalar_lea.sflag [#allocation4], 1
    %1245 = vsyncpa %s1244, 1

</llo_original>
